<compile_context>
chip_gen: v7x
topology: tpu7x:2x2x1
jax: 0.10.0
libtpu: 0.0.40
codegen_flags: <defaults>
</compile_context>

<pallas_src>
import functools
import math

import jax
import jax.numpy as jnp
from jax.experimental import pallas as pl
from jax.experimental.pallas import tpu as pltpu

LN_EPS = 1e-5
_SUBLANE = {4: 8, 2: 16, 1: 32}  # packed-row granularity by itemsize


def _round_up(x, m):
    return ((x + m - 1) // m) * m


# ------------------------------- kernel body -------------------------------- #

def _attention_kernel(*refs, grouped):
    """Fused Linear -> LayerNorm -> prior gating -> sigmoid on one batch tile."""
    if grouped:
        a_ref, p_ref, w_ref, b_ref, gam_ref, bet_ref, gmat_ref, o_ref = refs
    else:
        a_ref, p_ref, w_ref, b_ref, gam_ref, bet_ref, o_ref = refs

    # MXU matmul in the operands' native dtype, f32 accumulation.
    y = jnp.dot(a_ref[...], w_ref[...], preferred_element_type=jnp.float32)
    y = y + b_ref[...].astype(jnp.float32)

    # LayerNorm statistics in f32.
    if grouped:
        # Rows are lane-packed: each kernel row holds g original rows side by
        # side.  gmat = blockdiag(ones(dout,dout)/dout), so y @ gmat yields the
        # per-original-row mean already broadcast across its lane group.
        # Pure MXU work; no reshapes or cross-lane reductions.
        gmat = gmat_ref[...]
        mean = jnp.dot(y, gmat, preferred_element_type=jnp.float32)
        centered = y - mean
        var = jnp.dot(centered * centered, gmat, preferred_element_type=jnp.float32)
    else:
        mean = jnp.mean(y, axis=-1, keepdims=True)
        centered = y - mean
        var = jnp.mean(centered * centered, axis=-1, keepdims=True)

    y = centered * jax.lax.rsqrt(var + LN_EPS)                       # rsqrt -> EUP
    y = y * gam_ref[...].astype(jnp.float32) + bet_ref[...].astype(jnp.float32)

    mask = jax.nn.sigmoid(y * p_ref[...].astype(jnp.float32))        # sigmoid -> EUP
    o_ref[...] = mask.astype(o_ref.dtype)


# ------------------------------ pallas wrapper ------------------------------- #

def attention_transformer(a, priors, w, b, gamma, beta, *, block_rows=512):
    """a: [N, inp_dim], priors: [N, out_dim] -> mask: [N, out_dim] (dtype of a).

    w is pre-transposed to [inp_dim, out_dim].  block_rows = original batch
    rows per grid step (sweep 256..1024 on real shapes).  Call under jax.jit so
    the wrapper-side reshapes / kron are folded away.
    """
    N, din = a.shape
    dout = w.shape[1]
    out_dtype = a.dtype
    sub = _SUBLANE.get(jnp.dtype(out_dtype).itemsize, 8)

    # ---- lane-dense fold: pack g = 128//dout consecutive rows into lanes ----
    g = 1
    if 0 < dout < 128 and 128 % dout == 0 and N % (128 // dout) == 0:
        g = 128 // dout

    if g > 1:
        a_k = a.reshape(N // g, g * din)              # free row-major reshapes
        p_k = priors.reshape(N // g, g * dout)
        w_k = jnp.kron(jnp.eye(g, dtype=w.dtype), w)  # block-diagonal weight
        b_k = jnp.tile(jnp.reshape(b, (1, dout)), (1, g))
        gam_k = jnp.tile(jnp.reshape(gamma, (1, dout)), (1, g))
        bet_k = jnp.tile(jnp.reshape(beta, (1, dout)), (1, g))
        gmat = jnp.kron(jnp.eye(g, dtype=jnp.float32),
                        jnp.full((dout, dout), 1.0 / dout, jnp.float32))
        extra_in = (gmat,)
    else:
        a_k, p_k, w_k = a, priors, w
        b_k = jnp.reshape(b, (1, dout))
        gam_k = jnp.reshape(gamma, (1, dout))
        bet_k = jnp.reshape(beta, (1, dout))
        extra_in = ()

    Nf, Ka = a_k.shape
    Do = w_k.shape[1]

    # ---- batch-tile selection: big tiles, no padding, >=2 steps if possible ----
    cand = max(block_rows // g, sub) // sub * sub
    if cand >= Nf:
        bm = Nf
        if Nf >= 2 * sub:             # give both v7x TensorCores a grid step
            bm = _round_up(pl.cdiv(Nf, 2), sub)
    else:
        bm = cand

    itm = jnp.dtype(out_dtype).itemsize
    pbytes = jnp.dtype(w_k.dtype).itemsize

    def vmem_need(rows):
        tiles = 2 * rows * (Ka + 2 * Do) * itm        # a / priors / out, double-buffered
        params = 2 * (Ka * Do + 3 * Do) * pbytes      # W, bias, gamma, beta
        if g > 1:
            params += 2 * Do * Do * 4                 # group-averaging matrix
        return tiles + params

    while bm > sub and vmem_need(bm) > (32 << 20):    # conservative across v5e/v6e/v7x
        bm = max(sub, (bm // 2) // sub * sub)
    grid = pl.cdiv(Nf, bm)
    vmem_limit = int(min(56 << 20, max(32 << 20, vmem_need(bm) * 3 // 2 + (4 << 20))))

    flops = 2 * Nf * Ka * Do + 10 * Nf * Do
    if g > 1:
        flops += 4 * Nf * Do * Do                     # stats matmuls
    cost = pl.CostEstimate(
        flops=flops,
        transcendentals=2 * Nf * Do,                  # sigmoid + rsqrt
        bytes_accessed=Nf * (Ka + 2 * Do) * itm + (Ka * Do + 3 * Do) * pbytes,
    )

    in_specs = [
        pl.BlockSpec((bm, Ka), lambda i: (i, 0)),     # a tile
        pl.BlockSpec((bm, Do), lambda i: (i, 0)),     # priors tile
        pl.BlockSpec((Ka, Do), lambda i: (0, 0)),     # W (VMEM-resident)
        pl.BlockSpec((1, Do), lambda i: (0, 0)),      # bias
        pl.BlockSpec((1, Do), lambda i: (0, 0)),      # LN gamma
        pl.BlockSpec((1, Do), lambda i: (0, 0)),      # LN beta
    ]
    if g > 1:
        in_specs.append(pl.BlockSpec((Do, Do), lambda i: (0, 0)))   # group matrix

    out = pl.pallas_call(
        functools.partial(_attention_kernel, grouped=(g > 1)),
        out_shape=jax.ShapeDtypeStruct((Nf, Do), out_dtype),
        grid=(grid,),
        in_specs=in_specs,
        out_specs=pl.BlockSpec((bm, Do), lambda i: (i, 0)),
        compiler_params=pltpu.CompilerParams(
            dimension_semantics=("parallel",),        # megacore-friendly
            vmem_limit_bytes=vmem_limit),
        cost_estimate=cost,
    )(a_k, p_k, w_k, b_k, gam_k, bet_k, *extra_in)

    if g > 1:
        out = out.reshape(N, dout)                    # free row-major reshape back
    return out


# --------------------------- parameters & reference -------------------------- #

def init_params(key, inp_dim, out_dim):
    kw, kb, kg, kbt = jax.random.split(key, 4)
    bound = 1.0 / math.sqrt(inp_dim)
    return dict(
        # stored transposed: [inp_dim, out_dim]
        w=jax.random.uniform(kw, (inp_dim, out_dim), jnp.float32, -bound, bound),
        b=jax.random.uniform(kb, (1, out_dim), jnp.float32, -bound, bound),
        gamma=1.0 + 0.05 * jax.random.normal(kg, (1, out_dim), jnp.float32),
        beta=0.05 * jax.random.normal(kbt, (1, out_dim), jnp.float32),
    )


def attention_transformer_ref(a, priors, p):
    y = a @ p["w"] + p["b"]
    mean = y.mean(-1, keepdims=True)
    var = ((y - mean) ** 2).mean(-1, keepdims=True)
    y = (y - mean) / jnp.sqrt(var + LN_EPS) * p["gamma"] + p["beta"]
    return jax.nn.sigmoid(y * priors)


# ----------------------------------- main ------------------------------------ #

if __name__ == "__main__":
    RELAX = 1.3  # stored by the module; does not affect the returned mask

    def run_case(key, N, din, dout, block_rows):
        ka, kp, kparam = jax.random.split(key, 3)
        a = jax.random.normal(ka, (N, din), jnp.float32)
        priors = jax.random.uniform(kp, (N, dout), jnp.float32, 0.5, 1.5)
        params = init_params(kparam, din, dout)

        fn = jax.jit(functools.partial(attention_transformer, block_rows=block_rows))
        mask = fn(a, priors, params["w"], params["b"], params["gamma"], params["beta"])
        mask = jax.block_until_ready(mask)

        ref = attention_transformer_ref(a, priors, params)
        if not jnp.allclose(mask, ref, atol=2e-4, rtol=2e-4):
            err = float(jnp.max(jnp.abs(mask - ref)))
            raise AssertionError(
                f"Pallas output mismatch (N={N}, din={din}, dout={dout}): max |err|={err}")

    key = jax.random.PRNGKey(0)
    k1, k2 = jax.random.split(key)
    # lane-dense folded path (out_dim < 128): multi-step grid with a ragged tail
    run_case(k1, N=72, din=16, dout=32, block_rows=32)
    # plain path (out_dim does not divide 128): also a ragged-tail grid
    run_case(k2, N=40, din=24, dout=48, block_rows=16)

    print("KERNEL_OK")
</pallas_src>

<mosaic_0001>
module attributes {stable_mosaic.version = 11 : i64} {
  func.func @_attention_kernel(%arg0: i32, %arg1: memref<8x64xf32, #tpu.memory_space<vmem>>, %arg2: memref<8x128xf32, #tpu.memory_space<vmem>>, %arg3: memref<64x128xf32, #tpu.memory_space<vmem>>, %arg4: memref<1x128xf32, #tpu.memory_space<vmem>>, %arg5: memref<1x128xf32, #tpu.memory_space<vmem>>, %arg6: memref<1x128xf32, #tpu.memory_space<vmem>>, %arg7: memref<128x128xf32, #tpu.memory_space<vmem>>, %arg8: memref<8x128xf32, #tpu.memory_space<vmem>>) attributes {dimension_semantics = [#tpu.dimension_semantics<parallel>], iteration_bounds = array<i64: 3>, scalar_prefetch = 0 : i64, scratch_operands = 0 : i64, tpu.core_type = #tpu.core_type<tc>, window_params = [{transform_indices = @transform_0, window_bounds = array<i64: 8, 64>}, {transform_indices = @transform_1, window_bounds = array<i64: 8, 128>}, {pipeline_mode = #tpu.pipeline_mode<synchronous>, transform_indices = @transform_2, window_bounds = array<i64: 64, 128>}, {pipeline_mode = #tpu.pipeline_mode<synchronous>, transform_indices = @transform_3, window_bounds = array<i64: 1, 128>}, {pipeline_mode = #tpu.pipeline_mode<synchronous>, transform_indices = @transform_4, window_bounds = array<i64: 1, 128>}, {pipeline_mode = #tpu.pipeline_mode<synchronous>, transform_indices = @transform_5, window_bounds = array<i64: 1, 128>}, {pipeline_mode = #tpu.pipeline_mode<synchronous>, transform_indices = @transform_6, window_bounds = array<i64: 128, 128>}, {transform_indices = @transform_7, window_bounds = array<i64: 8, 128>}]} {
    %c0 = arith.constant 0 : index
    %c0_0 = arith.constant 0 : index
    %0 = vector.load %arg1[%c0, %c0_0] : memref<8x64xf32, #tpu.memory_space<vmem>>, vector<8x64xf32>
    %c0_1 = arith.constant 0 : index
    %c0_2 = arith.constant 0 : index
    %1 = vector.load %arg3[%c0_1, %c0_2] : memref<64x128xf32, #tpu.memory_space<vmem>>, vector<64x128xf32>
    %cst = arith.constant dense<0.000000e+00> : vector<8x128xf32>
    %2 = tpu.matmul %0, %1, %cst {dimension_numbers = #tpu.dot_dimension_numbers<[1], [0], [0], [1], [0, 0, 1, 1], [], []>} : vector<8x64xf32>, vector<64x128xf32>, vector<8x128xf32> -> vector<8x128xf32>
    %c0_3 = arith.constant 0 : index
    %c0_4 = arith.constant 0 : index
    %3 = vector.load %arg4[%c0_3, %c0_4] : memref<1x128xf32, #tpu.memory_space<vmem>>, vector<1x128xf32>
    %4 = vector.broadcast %3 : vector<1x128xf32> to vector<8x128xf32>
    %5 = arith.addf %2, %4 : vector<8x128xf32>
    %c0_5 = arith.constant 0 : index
    %c0_6 = arith.constant 0 : index
    %6 = vector.load %arg7[%c0_5, %c0_6] : memref<128x128xf32, #tpu.memory_space<vmem>>, vector<128x128xf32>
    %cst_7 = arith.constant dense<0.000000e+00> : vector<8x128xf32>
    %7 = tpu.matmul %5, %6, %cst_7 {dimension_numbers = #tpu.dot_dimension_numbers<[1], [0], [0], [1], [0, 0, 1, 1], [], []>} : vector<8x128xf32>, vector<128x128xf32>, vector<8x128xf32> -> vector<8x128xf32>
    %8 = arith.subf %5, %7 : vector<8x128xf32>
    %9 = arith.mulf %8, %8 : vector<8x128xf32>
    %cst_8 = arith.constant dense<0.000000e+00> : vector<8x128xf32>
    %10 = tpu.matmul %9, %6, %cst_8 {dimension_numbers = #tpu.dot_dimension_numbers<[1], [0], [0], [1], [0, 0, 1, 1], [], []>} : vector<8x128xf32>, vector<128x128xf32>, vector<8x128xf32> -> vector<8x128xf32>
    %cst_9 = arith.constant 9.99999974E-6 : f32
    %11 = vector.broadcast %cst_9 : f32 to vector<8x128xf32>
    %12 = arith.addf %10, %11 : vector<8x128xf32>
    %13 = math.rsqrt %12 : vector<8x128xf32>
    %14 = arith.mulf %8, %13 : vector<8x128xf32>
    %c0_10 = arith.constant 0 : index
    %c0_11 = arith.constant 0 : index
    %15 = vector.load %arg5[%c0_10, %c0_11] : memref<1x128xf32, #tpu.memory_space<vmem>>, vector<1x128xf32>
    %16 = vector.broadcast %15 : vector<1x128xf32> to vector<8x128xf32>
    %17 = arith.mulf %14, %16 : vector<8x128xf32>
    %c0_12 = arith.constant 0 : index
    %c0_13 = arith.constant 0 : index
    %18 = vector.load %arg6[%c0_12, %c0_13] : memref<1x128xf32, #tpu.memory_space<vmem>>, vector<1x128xf32>
    %19 = vector.broadcast %18 : vector<1x128xf32> to vector<8x128xf32>
    %20 = arith.addf %17, %19 : vector<8x128xf32>
    %c0_14 = arith.constant 0 : index
    %c0_15 = arith.constant 0 : index
    %21 = vector.load %arg2[%c0_14, %c0_15] : memref<8x128xf32, #tpu.memory_space<vmem>>, vector<8x128xf32>
    %22 = arith.mulf %20, %21 : vector<8x128xf32>
    %23 = arith.negf %22 : vector<8x128xf32>
    %24 = math.exp %23 : vector<8x128xf32>
    %cst_16 = arith.constant 1.000000e+00 : f32
    %25 = vector.broadcast %cst_16 : f32 to vector<8x128xf32>
    %26 = arith.addf %25, %24 : vector<8x128xf32>
    %27 = arith.divf %25, %26 : vector<8x128xf32>
    %c0_17 = arith.constant 0 : index
    %c0_18 = arith.constant 0 : index
    %28 = vector.load %arg8[%c0_17, %c0_18] : memref<8x128xf32, #tpu.memory_space<vmem>>, vector<8x128xf32>
    tpu.vector_store %arg8[%c0_17, %c0_18], %27 {strides = array<i32>} : memref<8x128xf32, #tpu.memory_space<vmem>>, vector<8x128xf32>,
    return
  }
  func.func @transform_0(%arg0: i32) -> (i32, i32) {
    %c0_i32 = arith.constant 0 : i32
    %c0_i32_0 = arith.constant 0 : i32
    return %arg0, %c0_i32 : i32, i32
  }
  func.func @transform_1(%arg0: i32) -> (i32, i32) {
    %c0_i32 = arith.constant 0 : i32
    %c0_i32_0 = arith.constant 0 : i32
    return %arg0, %c0_i32 : i32, i32
  }
  func.func @transform_2(%arg0: i32) -> (i32, i32) {
    %c0_i32 = arith.constant 0 : i32
    %c0_i32_0 = arith.constant 0 : i32
    %c0_i32_1 = arith.constant 0 : i32
    return %c0_i32, %c0_i32_0 : i32, i32
  }
  func.func @transform_3(%arg0: i32) -> (i32, i32) {
    %c0_i32 = arith.constant 0 : i32
    %c0_i32_0 = arith.constant 0 : i32
    %c0_i32_1 = arith.constant 0 : i32
    return %c0_i32, %c0_i32_0 : i32, i32
  }
  func.func @transform_4(%arg0: i32) -> (i32, i32) {
    %c0_i32 = arith.constant 0 : i32
    %c0_i32_0 = arith.constant 0 : i32
    %c0_i32_1 = arith.constant 0 : i32
    return %c0_i32, %c0_i32_0 : i32, i32
  }
  func.func @transform_5(%arg0: i32) -> (i32, i32) {
    %c0_i32 = arith.constant 0 : i32
    %c0_i32_0 = arith.constant 0 : i32
    %c0_i32_1 = arith.constant 0 : i32
    return %c0_i32, %c0_i32_0 : i32, i32
  }
  func.func @transform_6(%arg0: i32) -> (i32, i32) {
    %c0_i32 = arith.constant 0 : i32
    %c0_i32_0 = arith.constant 0 : i32
    %c0_i32_1 = arith.constant 0 : i32
    return %c0_i32, %c0_i32_0 : i32, i32
  }
  func.func @transform_7(%arg0: i32) -> (i32, i32) {
    %c0_i32 = arith.constant 0 : i32
    %c0_i32_0 = arith.constant 0 : i32
    return %arg0, %c0_i32 : i32, i32
  }
}

</mosaic_0001>

<llo_original>
// kernel: attention_transformer.1
$region0: #{attention_transformer.1}
  #allocation0 [shape = 'u32[]', space=smem, size = 0x4, offset = 0x4, fixed_abs, tag = 'smem constant byte address 0x4 - core index']
  #allocation1 [shape = 'u32[144,128]{1,0:T(1,128)}', space=vmem, size = 0x12000, scoped, tag = 'internal scratch']
  %s0 = inlined_call_operand.vmem [shape: f32[18,64], index: 0, kind: input, shape index: {}]
  %s1 = inlined_call_operand.vmem [shape: f32[18,128], index: 1, kind: input, shape index: {}]
  %s2 = inlined_call_operand.vmem [shape: f32[64,128], index: 2, kind: input, shape index: {}]
  %s3 = inlined_call_operand.vmem [shape: f32[1,128], index: 3, kind: input, shape index: {}]
  %s4 = inlined_call_operand.vmem [shape: f32[1,128], index: 4, kind: input, shape index: {}]
  %s5 = inlined_call_operand.vmem [shape: f32[1,128], index: 5, kind: input, shape index: {}]
  %s6 = inlined_call_operand.vmem [shape: f32[128,128], index: 6, kind: input, shape index: {}]
  %s7 = inlined_call_operand.vmem [shape: f32[18,128], index: 7, kind: output, shape index: {}]
  %s8 = sld [smem:[#allocation0]]
  $region61: #{attention_transformer.1} parent=0
    _
  %s10 = ssub.s32 1, %s8
  %s11 = scalar_select 0, %s10, %s8
  loop: start=0, step=1, limit=5
  $region2: #{attention_transformer.1} parent=0 // loop_pre_header
    _
  $region3: #{attention_transformer.1} parent=0 // loop_header
    %s13 = sphi 0, %s17
    %p14 = scmp.ge.s32.totalorder %s13, 5
    %s23 = sphi 0, %s25
    %s26 = sphi 0, %s23
    %s27 = sphi 0, %s26
    %s43 = sphi 0, %s27
    %s49 = sphi 0, %s51
    %s52 = sphi 0, %s49
    %s53 = sphi 0, %s52
    %s69 = sphi 0, %s53
    %s73 = sphi 0, %s73
    %s75 = sphi 0, %s73
    %s76 = sphi 0, %s75
    %s90 = sphi 0, %s76
    %s94 = sphi 0, %s94
    %s96 = sphi 0, %s94
    %s97 = sphi 0, %s96
    %s111 = sphi 0, %s97
    %s115 = sphi 0, %s115
    %s117 = sphi 0, %s115
    %s118 = sphi 0, %s117
    %s132 = sphi 0, %s118
    %s136 = sphi 0, %s136
    %s138 = sphi 0, %s136
    %s139 = sphi 0, %s138
    %s153 = sphi 0, %s139
    %s157 = sphi 0, %s157
    %s159 = sphi 0, %s157
    %s160 = sphi 0, %s159
    %s174 = sphi 0, %s160
    %s180 = sphi 0, %s182
    %s183 = sphi 0, %s180
    %s184 = sphi 0, %s183
    %s200 = sphi 0, %s184
  $region4: #{attention_transformer.1} parent=0 // loop_header_branch
    %16 = sbr.rel (%p14) target = $region8
  $region5: #{attention_transformer.1} parent=0 // loop_body
    %s18 = ssub.s32 %s13, 1
    %s19 = ssub.s32 %s13, 2
    %s20 = sadd.s32 %s13, 1
    %s21 = ssub.s32 %s13, %s20
    %p22 = scmp.eq.s32.totalorder %s21, 0
    %s24 = sadd.s32 %s23, 1
    %s25 = scalar_select %p22, %s23, %s24
    %p28 = pneg %p22
    %p29 = scmp.eq.s32.totalorder %s13, 2
    %p30 = por %p28, %p29
    %p31 = scmp.ne.s32.totalorder %s23, %s26
    %p32 = scmp.eq.s32.totalorder %s13, 0
    %p33 = por %p31, %p32
    %p34 = scmp.ne.s32.totalorder %s23, %s26
    %p35 = scmp.eq.s32.totalorder %s18, 2
    %p36 = por %p34, %p35
    %p37 = scmp.ne.s32.totalorder %s26, %s27
    %p38 = scmp.eq.s32.totalorder %s18, 0
    %p39 = por %p37, %p38
    %p40 = scmp.ne.s32.totalorder %s26, %s27
    %p41 = scmp.eq.s32.totalorder %s19, 2
    %p42 = por %p40, %p41
    %p44 = scmp.ne.s32.totalorder %s27, %s43
    %p45 = scmp.eq.s32.totalorder %s19, 0
    %p46 = por %p44, %p45
    %s47 = ssub.s32 %s13, %s20
    %p48 = scmp.eq.s32.totalorder %s47, 0
    %s50 = sadd.s32 %s49, 1
    %s51 = scalar_select %p48, %s49, %s50
    %p54 = pneg %p48
    %p55 = scmp.eq.s32.totalorder %s13, 2
    %p56 = por %p54, %p55
    %p57 = scmp.ne.s32.totalorder %s49, %s52
    %p58 = scmp.eq.s32.totalorder %s13, 0
    %p59 = por %p57, %p58
    %p60 = scmp.ne.s32.totalorder %s49, %s52
    %p61 = scmp.eq.s32.totalorder %s18, 2
    %p62 = por %p60, %p61
    %p63 = scmp.ne.s32.totalorder %s52, %s53
    %p64 = scmp.eq.s32.totalorder %s18, 0
    %p65 = por %p63, %p64
    %p66 = scmp.ne.s32.totalorder %s52, %s53
    %p67 = scmp.eq.s32.totalorder %s19, 2
    %p68 = por %p66, %p67
    %p70 = scmp.ne.s32.totalorder %s53, %s69
    %p71 = scmp.eq.s32.totalorder %s19, 0
    %p72 = por %p70, %p71
    %s74 = sadd.s32 %s73, 1
    %p77 = scmp.eq.s32.totalorder %s13, 2
    %p78 = scmp.ne.s32.totalorder %s73, %s75
    %p79 = scmp.eq.s32.totalorder %s13, 0
    %p80 = por %p78, %p79
    %p81 = scmp.ne.s32.totalorder %s73, %s75
    %p82 = scmp.eq.s32.totalorder %s18, 2
    %p83 = por %p81, %p82
    %p84 = scmp.ne.s32.totalorder %s75, %s76
    %p85 = scmp.eq.s32.totalorder %s18, 0
    %p86 = por %p84, %p85
    %p87 = scmp.ne.s32.totalorder %s75, %s76
    %p88 = scmp.eq.s32.totalorder %s19, 2
    %p89 = por %p87, %p88
    %p91 = scmp.ne.s32.totalorder %s76, %s90
    %p92 = scmp.eq.s32.totalorder %s19, 0
    %p93 = por %p91, %p92
    %s95 = sadd.s32 %s94, 1
    %p98 = scmp.eq.s32.totalorder %s13, 2
    %p99 = scmp.ne.s32.totalorder %s94, %s96
    %p100 = scmp.eq.s32.totalorder %s13, 0
    %p101 = por %p99, %p100
    %p102 = scmp.ne.s32.totalorder %s94, %s96
    %p103 = scmp.eq.s32.totalorder %s18, 2
    %p104 = por %p102, %p103
    %p105 = scmp.ne.s32.totalorder %s96, %s97
    %p106 = scmp.eq.s32.totalorder %s18, 0
    %p107 = por %p105, %p106
    %p108 = scmp.ne.s32.totalorder %s96, %s97
    %p109 = scmp.eq.s32.totalorder %s19, 2
    %p110 = por %p108, %p109
    %p112 = scmp.ne.s32.totalorder %s97, %s111
    %p113 = scmp.eq.s32.totalorder %s19, 0
    %p114 = por %p112, %p113
    %s116 = sadd.s32 %s115, 1
    %p119 = scmp.eq.s32.totalorder %s13, 2
    %p120 = scmp.ne.s32.totalorder %s115, %s117
    %p121 = scmp.eq.s32.totalorder %s13, 0
    %p122 = por %p120, %p121
    %p123 = scmp.ne.s32.totalorder %s115, %s117
    %p124 = scmp.eq.s32.totalorder %s18, 2
    %p125 = por %p123, %p124
    %p126 = scmp.ne.s32.totalorder %s117, %s118
    %p127 = scmp.eq.s32.totalorder %s18, 0
    %p128 = por %p126, %p127
    %p129 = scmp.ne.s32.totalorder %s117, %s118
    %p130 = scmp.eq.s32.totalorder %s19, 2
    %p131 = por %p129, %p130
    %p133 = scmp.ne.s32.totalorder %s118, %s132
    %p134 = scmp.eq.s32.totalorder %s19, 0
    %p135 = por %p133, %p134
    %s137 = sadd.s32 %s136, 1
    %p140 = scmp.eq.s32.totalorder %s13, 2
    %p141 = scmp.ne.s32.totalorder %s136, %s138
    %p142 = scmp.eq.s32.totalorder %s13, 0
    %p143 = por %p141, %p142
    %p144 = scmp.ne.s32.totalorder %s136, %s138
    %p145 = scmp.eq.s32.totalorder %s18, 2
    %p146 = por %p144, %p145
    %p147 = scmp.ne.s32.totalorder %s138, %s139
    %p148 = scmp.eq.s32.totalorder %s18, 0
    %p149 = por %p147, %p148
    %p150 = scmp.ne.s32.totalorder %s138, %s139
    %p151 = scmp.eq.s32.totalorder %s19, 2
    %p152 = por %p150, %p151
    %p154 = scmp.ne.s32.totalorder %s139, %s153
    %p155 = scmp.eq.s32.totalorder %s19, 0
    %p156 = por %p154, %p155
    %s158 = sadd.s32 %s157, 1
    %p161 = scmp.eq.s32.totalorder %s13, 2
    %p162 = scmp.ne.s32.totalorder %s157, %s159
    %p163 = scmp.eq.s32.totalorder %s13, 0
    %p164 = por %p162, %p163
    %p165 = scmp.ne.s32.totalorder %s157, %s159
    %p166 = scmp.eq.s32.totalorder %s18, 2
    %p167 = por %p165, %p166
    %p168 = scmp.ne.s32.totalorder %s159, %s160
    %p169 = scmp.eq.s32.totalorder %s18, 0
    %p170 = por %p168, %p169
    %p171 = scmp.ne.s32.totalorder %s159, %s160
    %p172 = scmp.eq.s32.totalorder %s19, 2
    %p173 = por %p171, %p172
    %p175 = scmp.ne.s32.totalorder %s160, %s174
    %p176 = scmp.eq.s32.totalorder %s19, 0
    %p177 = por %p175, %p176
    %s178 = ssub.s32 %s13, %s20
    %p179 = scmp.eq.s32.totalorder %s178, 0
    %s181 = sadd.s32 %s180, 1
    %s182 = scalar_select %p179, %s180, %s181
    %p185 = pneg %p179
    %p186 = scmp.eq.s32.totalorder %s13, 2
    %p187 = por %p185, %p186
    %p188 = scmp.ne.s32.totalorder %s180, %s183
    %p189 = scmp.eq.s32.totalorder %s13, 0
    %p190 = por %p188, %p189
    %p191 = scmp.ne.s32.totalorder %s180, %s183
    %p192 = scmp.eq.s32.totalorder %s18, 2
    %p193 = por %p191, %p192
    %p194 = scmp.ne.s32.totalorder %s183, %s184
    %p195 = scmp.eq.s32.totalorder %s18, 0
    %p196 = por %p194, %p195
    %p197 = scmp.ne.s32.totalorder %s183, %s184
    %p198 = scmp.eq.s32.totalorder %s19, 2
    %p199 = por %p197, %p198
    %p201 = scmp.ne.s32.totalorder %s184, %s200
    %p202 = scmp.eq.s32.totalorder %s19, 0
    %p203 = por %p201, %p202
    %p204 = scmp.le.s32.totalorder 1, %s13
    %p205 = scmp.lt.s32.totalorder %s13, 4
    %p206 = pnand %p204, %p205
    %p207 = pneg %p206
    // Predicated region
    $region9: #{attention_transformer.1} parent=5 // pred_check
      _
    $region10: #{attention_transformer.1} parent=5 // pred_check_branch
      %209 = sbr.rel (%p206) target = $region12
    $region11: #{attention_transformer.1} parent=5 // pred_region
      %s210 = ssub.s32 %s13, 1
      // Predicated region
      $region13: #{attention_transformer.1} parent=11 // pred_check
        %p211 = pneg %p86
      $region14: #{attention_transformer.1} parent=11 // pred_check_branch
        %213 = sbr.rel (%p211) target = $region16
      $region15: #{attention_transformer.1} parent=11 // pred_region
        _
      $region16: #{attention_transformer.1} parent=11 // pred_fallthru
        _
      // Predicated region
      $region17: #{attention_transformer.1} parent=11 // pred_check
        %p214 = pneg %p107
      $region18: #{attention_transformer.1} parent=11 // pred_check_branch
        %216 = sbr.rel (%p214) target = $region20
      $region19: #{attention_transformer.1} parent=11 // pred_region
        _
      $region20: #{attention_transformer.1} parent=11 // pred_fallthru
        _
      // Predicated region
      $region21: #{attention_transformer.1} parent=11 // pred_check
        %p217 = pneg %p128
      $region22: #{attention_transformer.1} parent=11 // pred_check_branch
        %219 = sbr.rel (%p217) target = $region24
      $region23: #{attention_transformer.1} parent=11 // pred_region
        _
      $region24: #{attention_transformer.1} parent=11 // pred_fallthru
        _
      // Predicated region
      $region25: #{attention_transformer.1} parent=11 // pred_check
        %p220 = pneg %p149
      $region26: #{attention_transformer.1} parent=11 // pred_check_branch
        %222 = sbr.rel (%p220) target = $region28
      $region27: #{attention_transformer.1} parent=11 // pred_region
        _
      $region28: #{attention_transformer.1} parent=11 // pred_fallthru
        _
      // Predicated region
      $region29: #{attention_transformer.1} parent=11 // pred_check
        %p223 = pneg %p170
      $region30: #{attention_transformer.1} parent=11 // pred_check_branch
        %225 = sbr.rel (%p223) target = $region32
      $region31: #{attention_transformer.1} parent=11 // pred_region
        _
      $region32: #{attention_transformer.1} parent=11 // pred_fallthru
        _
    $region12: #{attention_transformer.1} parent=5 // pred_fallthru
      _
    %p226 = scmp.lt.s32.totalorder %s13, 3
    // Predicated region
    $region33: #{attention_transformer.1} parent=5 // pred_check
      %p227 = pneg %p226
    $region34: #{attention_transformer.1} parent=5 // pred_check_branch
      %229 = sbr.rel (%p227) target = $region36
    $region35: #{attention_transformer.1} parent=5 // pred_region
      // Predicated region
      $region37: #{attention_transformer.1} parent=35 // pred_check
        %p230 = pneg %p33
      $region38: #{attention_transformer.1} parent=35 // pred_check_branch
        %232 = sbr.rel (%p230) target = $region40
      $region39: #{attention_transformer.1} parent=35 // pred_region
        %p233 = scmp.lt.s32.totalorder %s13, 2
        %s234 = scalar_select %p233, %s13, 2
        %s235 = smul.addr %s234, 8
        %s236 = scalar_lea.vmem %s0, %s235
      $region40: #{attention_transformer.1} parent=35 // pred_fallthru
        _
      // Predicated region
      $region41: #{attention_transformer.1} parent=35 // pred_check
        %p237 = pneg %p59
      $region42: #{attention_transformer.1} parent=35 // pred_check_branch
        %239 = sbr.rel (%p237) target = $region44
      $region43: #{attention_transformer.1} parent=35 // pred_region
        %p240 = scmp.lt.s32.totalorder %s13, 2
        %s241 = scalar_select %p240, %s13, 2
        %s242 = smul.addr %s241, 8
        %s243 = scalar_lea.vmem %s1, %s242
      $region44: #{attention_transformer.1} parent=35 // pred_fallthru
        _
    $region36: #{attention_transformer.1} parent=5 // pred_fallthru
      _
    %p244 = scmp.le.s32.totalorder 1, %s13
    %p245 = scmp.lt.s32.totalorder %s13, 4
    %p246 = pnand %p244, %p245
    %p247 = pneg %p246
    // Predicated region
    $region45: #{attention_transformer.1} parent=5 // pred_check
      _
    $region46: #{attention_transformer.1} parent=5 // pred_check_branch
      %249 = sbr.rel (%p246) target = $region48
    $region47: #{attention_transformer.1} parent=5 // pred_region
      %s250 = ssub.s32 %s13, 1
      %p251 = scmp.lt.s32.totalorder %s18, 2
      %s252 = scalar_select %p251, %s18, 2
      %s253 = smul.addr %s252, 8
      %s254 = scalar_lea.vmem %s0, %s253
      %p255 = pneg %p39
      %p256 = pneg %p36
      %p257 = scmp.lt.s32.totalorder %s18, 2
      %s258 = scalar_select %p257, %s18, 2
      %s259 = smul.addr %s258, 8
      %s260 = scalar_lea.vmem %s1, %s259
      %p261 = pneg %p65
      %p262 = pneg %p62
      %p263 = pneg %p86
      %p264 = pneg %p83
      %p265 = pneg %p107
      %p266 = pneg %p104
      %p267 = pneg %p128
      %p268 = pneg %p125
      %p269 = pneg %p149
      %p270 = pneg %p146
      %p271 = pneg %p170
      %p272 = pneg %p167
      %p273 = pneg %p196
      %p274 = pneg %p193
      %p275 = scmp.lt.s32.totalorder %s18, 2
      %s276 = scalar_select %p275, %s18, 2
      %s277 = smul.addr %s276, 8
      %s278 = scalar_lea.vmem %s7, %s277
      %p279 = scmp.lt.s32.totalorder %s18, 2
      %s280 = scalar_select %p279, %s18, 2
      %s281 = smul.addr %s280, 8
      %s282 = scalar_lea.vmem %s0, %s281
      %p283 = scmp.lt.s32.totalorder %s18, 2
      %s284 = scalar_select %p283, %s18, 2
      %s285 = smul.addr %s284, 8
      %s286 = scalar_lea.vmem %s1, %s285
      %p287 = scmp.lt.s32.totalorder %s18, 2
      %s288 = scalar_select %p287, %s18, 2
      %s289 = smul.addr %s288, 8
      %s290 = scalar_lea.vmem %s7, %s289
      %v291 = vld [vmem:[%s282] sm:$0xff]
      %v292 = vld [vmem:[%s2] sm:$0xff]
      %v293 = vld [vmem:[%s2 + $0x8] sm:$0xff]
      %v294 = vld [vmem:[%s2 + $0x10] sm:$0xff]
      %v295 = vld [vmem:[%s2 + $0x18] sm:$0xff]
      %v296 = vld [vmem:[%s2 + $0x20] sm:$0xff]
      %v297 = vld [vmem:[%s2 + $0x28] sm:$0xff]
      %v298 = vld [vmem:[%s2 + $0x30] sm:$0xff]
      %v299 = vld [vmem:[%s2 + $0x38] sm:$0xff]
      %v300 = vld [vmem:[%s3] sm:$0x1]
      %v302 = vlaneseq
      %v303 = vshrl.u32 %v302, 7
      %v304 = vsub.s32 0, %v303
      %v305 = vrot.slane %v300, %v304
      %vm307 = vcmask 523264
      %v309 = vsel %vm307, %v291, 0
      %311 = vmatprep.subr.mxu0 0.0
      %312 = vmatpush1.msra.mxu0 %v292
      %313 = vmatprep.subr.mxu0 0.0
      %314 = vmatpush1.msra.mxu0 %v293
      %315 = vmatprep.subr.mxu0 0.0
      %316 = vmatpush1.msra.mxu0 %v294
      %317 = vmatprep.subr.mxu0 0.0
      %318 = vmatpush1.msra.mxu0 %v295
      %319 = vmatprep.subr.mxu0 0.0
      %320 = vmatpush1.msra.mxu0 %v296
      %321 = vmatprep.subr.mxu0 0.0
      %322 = vmatpush1.msra.mxu0 %v297
      %323 = vmatprep.subr.mxu0 0.0
      %324 = vmatpush1.msra.mxu0 %v298
      %325 = vmatprep.subr.mxu0 0.0
      %326 = vmatpush1.msra.mxu0 %v299
      %327 = vmatprep.subr.mxu0 0.0
      %328 = vmatpush1.msra.mxu0 0.0
      %329 = vmatprep.subr.mxu0 0.0
      %330 = vmatpush1.msra.mxu0 0.0
      %331 = vmatprep.subr.mxu0 0.0
      %332 = vmatpush1.msra.mxu0 0.0
      %333 = vmatprep.subr.mxu0 0.0
      %334 = vmatpush1.msra.mxu0 0.0
      %335 = vmatprep.subr.mxu0 0.0
      %336 = vmatpush1.msra.mxu0 0.0
      %337 = vmatprep.subr.mxu0 0.0
      %338 = vmatpush1.msra.mxu0 0.0
      %339 = vmatprep.subr.mxu0 0.0
      %340 = vmatpush1.msra.mxu0 0.0
      %341 = vmatprep.subr.mxu0 0.0
      %342 = vmatpush1.msra.mxu0 0.0
      %343 = vmatprep.subr.mxu0 0.0
      %344 = vmatpush1.msra.mxu0 0.0
      %345 = vmatprep.subr.mxu0 0.0
      %346 = vmatpush1.msra.mxu0 0.0
      %347 = vmatprep.subr.mxu0 0.0
      %348 = vmatpush1.msra.mxu0 0.0
      %349 = vmatprep.subr.mxu0 0.0
      %350 = vmatpush1.msra.mxu0 0.0
      %351 = vmatprep.subr.mxu0 0.0
      %352 = vmatpush1.msra.mxu0 0.0
      %353 = vmatprep.subr.mxu0 0.0
      %354 = vmatpush1.msra.mxu0 0.0
      %355 = vmatprep.subr.mxu0 0.0
      %356 = vmatpush1.msra.mxu0 0.0
      %357 = vmatprep.subr.mxu0 0.0
      %358 = vmatpush1.msra.mxu0 0.0
      %359 = vmatprep.subr.mxu0 0.0
      %360 = vmatpush1.msra.mxu0 0.0
      %361 = vmatprep.subr.mxu0 0.0
      %362 = vmatpush1.msra.mxu0 0.0
      %363 = vmatprep.subr.mxu0 0.0
      %364 = vmatpush1.msra.mxu0 0.0
      %365 = vmatprep.subr.mxu0 0.0
      %366 = vmatpush1.msra.mxu0 0.0
      %367 = vmatprep.subr.mxu0 0.0
      %368 = vmatpush1.msra.mxu0 0.0
      %369 = vmatprep.subr.mxu0 0.0
      %370 = vmatpush1.msra.mxu0 0.0
      %371 = vmatprep.subr.mxu0 0.0
      %372 = vmatpush1.msra.mxu0 0.0
      %373 = vmatprep.subr.mxu0 0.0
      %374 = vmatpush1.msra.mxu0 0.0
      %375 = vmatprep.mubr.f32.mxu0 0.0
      %376 = vmatmul.mubr.f32.gmra.mrb[0].mxu0 %v309
      %v377 = vpop.f32.mrb[0].mxu0
      %v378 = vadd.f32 %v305, %v377
      %v379 = vpop.f32.mrb[0].mxu0
      %380 = vdwg.mxu0
      %v381 = vld [vmem:[%s6] sm:$0xff]
      %v382 = vld [vmem:[%s6 + $0x8] sm:$0xff]
      %v383 = vld [vmem:[%s6 + $0x10] sm:$0xff]
      %v384 = vld [vmem:[%s6 + $0x18] sm:$0xff]
      %v385 = vld [vmem:[%s6 + $0x20] sm:$0xff]
      %v386 = vld [vmem:[%s6 + $0x28] sm:$0xff]
      %v387 = vld [vmem:[%s6 + $0x30] sm:$0xff]
      %v388 = vld [vmem:[%s6 + $0x38] sm:$0xff]
      %v389 = vld [vmem:[%s6 + $0x40] sm:$0xff]
      %v390 = vld [vmem:[%s6 + $0x48] sm:$0xff]
      %v391 = vld [vmem:[%s6 + $0x50] sm:$0xff]
      %v392 = vld [vmem:[%s6 + $0x58] sm:$0xff]
      %v393 = vld [vmem:[%s6 + $0x60] sm:$0xff]
      %v394 = vld [vmem:[%s6 + $0x68] sm:$0xff]
      %v395 = vld [vmem:[%s6 + $0x70] sm:$0xff]
      %v396 = vld [vmem:[%s6 + $0x78] sm:$0xff]
      %397 = vmatprep.subr.mxu0 0.0
      %398 = vmatpush1.msra.mxu0 %v381
      %399 = vmatprep.subr.mxu0 0.0
      %400 = vmatpush1.msra.mxu0 %v382
      %401 = vmatprep.subr.mxu0 0.0
      %402 = vmatpush1.msra.mxu0 %v383
      %403 = vmatprep.subr.mxu0 0.0
      %404 = vmatpush1.msra.mxu0 %v384
      %405 = vmatprep.subr.mxu0 0.0
      %406 = vmatpush1.msra.mxu0 %v385
      %407 = vmatprep.subr.mxu0 0.0
      %408 = vmatpush1.msra.mxu0 %v386
      %409 = vmatprep.subr.mxu0 0.0
      %410 = vmatpush1.msra.mxu0 %v387
      %411 = vmatprep.subr.mxu0 0.0
      %412 = vmatpush1.msra.mxu0 %v388
      %413 = vmatprep.subr.mxu0 0.0
      %414 = vmatpush1.msra.mxu0 %v389
      %415 = vmatprep.subr.mxu0 0.0
      %416 = vmatpush1.msra.mxu0 %v390
      %417 = vmatprep.subr.mxu0 0.0
      %418 = vmatpush1.msra.mxu0 %v391
      %419 = vmatprep.subr.mxu0 0.0
      %420 = vmatpush1.msra.mxu0 %v392
      %421 = vmatprep.subr.mxu0 0.0
      %422 = vmatpush1.msra.mxu0 %v393
      %423 = vmatprep.subr.mxu0 0.0
      %424 = vmatpush1.msra.mxu0 %v394
      %425 = vmatprep.subr.mxu0 0.0
      %426 = vmatpush1.msra.mxu0 %v395
      %427 = vmatprep.subr.mxu0 0.0
      %428 = vmatpush1.msra.mxu0 %v396
      %429 = vmatprep.subr.mxu0 0.0
      %430 = vmatpush1.msra.mxu0 0.0
      %431 = vmatprep.subr.mxu0 0.0
      %432 = vmatpush1.msra.mxu0 0.0
      %433 = vmatprep.subr.mxu0 0.0
      %434 = vmatpush1.msra.mxu0 0.0
      %435 = vmatprep.subr.mxu0 0.0
      %436 = vmatpush1.msra.mxu0 0.0
      %437 = vmatprep.subr.mxu0 0.0
      %438 = vmatpush1.msra.mxu0 0.0
      %439 = vmatprep.subr.mxu0 0.0
      %440 = vmatpush1.msra.mxu0 0.0
      %441 = vmatprep.subr.mxu0 0.0
      %442 = vmatpush1.msra.mxu0 0.0
      %443 = vmatprep.subr.mxu0 0.0
      %444 = vmatpush1.msra.mxu0 0.0
      %445 = vmatprep.subr.mxu0 0.0
      %446 = vmatpush1.msra.mxu0 0.0
      %447 = vmatprep.subr.mxu0 0.0
      %448 = vmatpush1.msra.mxu0 0.0
      %449 = vmatprep.subr.mxu0 0.0
      %450 = vmatpush1.msra.mxu0 0.0
      %451 = vmatprep.subr.mxu0 0.0
      %452 = vmatpush1.msra.mxu0 0.0
      %453 = vmatprep.subr.mxu0 0.0
      %454 = vmatpush1.msra.mxu0 0.0
      %455 = vmatprep.subr.mxu0 0.0
      %456 = vmatpush1.msra.mxu0 0.0
      %457 = vmatprep.subr.mxu0 0.0
      %458 = vmatpush1.msra.mxu0 0.0
      %459 = vmatprep.subr.mxu0 0.0
      %460 = vmatpush1.msra.mxu0 0.0
      %461 = vmatprep.mubr.f32.mxu0 0.0
      %462 = vmatmul.mubr.f32.gmra.mrb[0].mxu0 %v378
      %v463 = vpop.f32.mrb[0].mxu0
      %v464 = vadd.f32 0.0, %v463
      %v465 = vpop.f32.mrb[0].mxu0
      %466 = vdwg.mxu0
      %v467 = vsub.f32 %v378, %v464
      %v468 = vmul.f32 %v467, %v467
      %469 = vmatprep.subr.mxu0 0.0
      %470 = vmatpush1.msra.mxu0 %v381
      %471 = vmatprep.subr.mxu0 0.0
      %472 = vmatpush1.msra.mxu0 %v382
      %473 = vmatprep.subr.mxu0 0.0
      %474 = vmatpush1.msra.mxu0 %v383
      %475 = vmatprep.subr.mxu0 0.0
      %476 = vmatpush1.msra.mxu0 %v384
      %477 = vmatprep.subr.mxu0 0.0
      %478 = vmatpush1.msra.mxu0 %v385
      %479 = vmatprep.subr.mxu0 0.0
      %480 = vmatpush1.msra.mxu0 %v386
      %481 = vmatprep.subr.mxu0 0.0
      %482 = vmatpush1.msra.mxu0 %v387
      %483 = vmatprep.subr.mxu0 0.0
      %484 = vmatpush1.msra.mxu0 %v388
      %485 = vmatprep.subr.mxu0 0.0
      %486 = vmatpush1.msra.mxu0 %v389
      %487 = vmatprep.subr.mxu0 0.0
      %488 = vmatpush1.msra.mxu0 %v390
      %489 = vmatprep.subr.mxu0 0.0
      %490 = vmatpush1.msra.mxu0 %v391
      %491 = vmatprep.subr.mxu0 0.0
      %492 = vmatpush1.msra.mxu0 %v392
      %493 = vmatprep.subr.mxu0 0.0
      %494 = vmatpush1.msra.mxu0 %v393
      %495 = vmatprep.subr.mxu0 0.0
      %496 = vmatpush1.msra.mxu0 %v394
      %497 = vmatprep.subr.mxu0 0.0
      %498 = vmatpush1.msra.mxu0 %v395
      %499 = vmatprep.subr.mxu0 0.0
      %500 = vmatpush1.msra.mxu0 %v396
      %501 = vmatprep.subr.mxu0 0.0
      %502 = vmatpush1.msra.mxu0 0.0
      %503 = vmatprep.subr.mxu0 0.0
      %504 = vmatpush1.msra.mxu0 0.0
      %505 = vmatprep.subr.mxu0 0.0
      %506 = vmatpush1.msra.mxu0 0.0
      %507 = vmatprep.subr.mxu0 0.0
      %508 = vmatpush1.msra.mxu0 0.0
      %509 = vmatprep.subr.mxu0 0.0
      %510 = vmatpush1.msra.mxu0 0.0
      %511 = vmatprep.subr.mxu0 0.0
      %512 = vmatpush1.msra.mxu0 0.0
      %513 = vmatprep.subr.mxu0 0.0
      %514 = vmatpush1.msra.mxu0 0.0
      %515 = vmatprep.subr.mxu0 0.0
      %516 = vmatpush1.msra.mxu0 0.0
      %517 = vmatprep.subr.mxu0 0.0
      %518 = vmatpush1.msra.mxu0 0.0
      %519 = vmatprep.subr.mxu0 0.0
      %520 = vmatpush1.msra.mxu0 0.0
      %521 = vmatprep.subr.mxu0 0.0
      %522 = vmatpush1.msra.mxu0 0.0
      %523 = vmatprep.subr.mxu0 0.0
      %524 = vmatpush1.msra.mxu0 0.0
      %525 = vmatprep.subr.mxu0 0.0
      %526 = vmatpush1.msra.mxu0 0.0
      %527 = vmatprep.subr.mxu0 0.0
      %528 = vmatpush1.msra.mxu0 0.0
      %529 = vmatprep.subr.mxu0 0.0
      %530 = vmatpush1.msra.mxu0 0.0
      %531 = vmatprep.subr.mxu0 0.0
      %532 = vmatpush1.msra.mxu0 0.0
      %533 = vmatprep.mubr.f32.mxu0 0.0
      %534 = vmatmul.mubr.f32.gmra.mrb[0].mxu0 %v468
      %v535 = vpop.f32.mrb[0].mxu0
      %v536 = vadd.f32 1e-05, %v535
      %v537 = vpop.f32.mrb[0].mxu0
      %538 = vdwg.mxu0
      %v539 = vrsqrt.pop %v536
      %v540 = vmul.f32 %v467, %v539
      %v541 = vld [vmem:[%s4] sm:$0x1]
      %v543 = vlaneseq
      %v544 = vshrl.u32 %v543, 7
      %v545 = vsub.s32 0, %v544
      %v546 = vrot.slane %v541, %v545
      %v548 = vmul.f32 %v540, %v546
      %v549 = vld [vmem:[%s5] sm:$0x1]
      %v551 = vlaneseq
      %v552 = vshrl.u32 %v551, 7
      %v553 = vsub.s32 0, %v552
      %v554 = vrot.slane %v549, %v553
      %v556 = vadd.f32 %v548, %v554
      %v557 = vld [vmem:[%s286] sm:$0xff]
      %v558 = vmul.f32 %v556, %v557
      %v559 = vxor.u32 %v558, 2147483648
      %v560 = vmul.f32 %v559, 1.442695
      %v561 = vpow.pop %v560
      %v562 = vadd.f32 %v561, 1.0
      %v563 = vrcp.pop %v562
      %v564 = vmul.f32 1.0, %v563
      %565 = vst [vmem:[%s290] sm:$0xff] %v564
      %p566 = scmp.lt.s32.totalorder %s18, 2
      %s567 = scalar_select %p566, %s18, 2
      %s568 = smul.addr %s567, 8
      %s569 = scalar_lea.vmem %s7, %s568
      // Predicated region
      $region49: #{attention_transformer.1} parent=47 // pred_check
        %p570 = pneg %p193
      $region50: #{attention_transformer.1} parent=47 // pred_check_branch
        %572 = sbr.rel (%p570) target = $region52
      $region51: #{attention_transformer.1} parent=47 // pred_region
        _
      $region52: #{attention_transformer.1} parent=47 // pred_fallthru
        _
    $region48: #{attention_transformer.1} parent=5 // pred_fallthru
      _
    %p573 = scmp.le.s32.totalorder 2, %s13
    // Predicated region
    $region53: #{attention_transformer.1} parent=5 // pred_check
      %p574 = pneg %p573
    $region54: #{attention_transformer.1} parent=5 // pred_check_branch
      %576 = sbr.rel (%p574) target = $region56
    $region55: #{attention_transformer.1} parent=5 // pred_region
      %s577 = ssub.s32 %s13, 2
      // Predicated region
      $region57: #{attention_transformer.1} parent=55 // pred_check
        %p578 = pneg %p199
      $region58: #{attention_transformer.1} parent=55 // pred_check_branch
        %580 = sbr.rel (%p578) target = $region60
      $region59: #{attention_transformer.1} parent=55 // pred_region
        %p581 = scmp.lt.s32.totalorder %s19, 2
        %s582 = scalar_select %p581, %s19, 2
        %s583 = smul.addr %s582, 8
        %s584 = scalar_lea.vmem %s7, %s583
      $region60: #{attention_transformer.1} parent=55 // pred_fallthru
        _
    $region56: #{attention_transformer.1} parent=5 // pred_fallthru
      _
  $region6: #{attention_transformer.1} parent=0 // loop_footer
    %s17 = sadd.s32 1, %s13
  $region7: #{attention_transformer.1} parent=0 // loop_footer_branch
    %12 = sbr.rel target = $region3
  $region8: #{attention_transformer.1} parent=0 // loop_exit
    _

</llo_original>
